<compile_context>
chip_gen: v5e
topology: v5e:2x2
jax: 0.10.0
libtpu: 0.0.40
codegen_flags: <defaults>
</compile_context>

<pallas_src>
import functools

import jax
import jax.numpy as jnp
from jax.experimental import pallas as pl
from jax.experimental.pallas import tpu as pltpu

LOG_STD_MIN = -1.0
LOG_STD_MAX = 1.0
LN_EPS = 1e-5  # PyTorch nn.LayerNorm default


def _layernorm(x, gamma, beta):
    # Two-moment form: both reductions are independent (back-to-back XLU ops).
    mu = jnp.mean(x, axis=-1, keepdims=True)
    ms = jnp.mean(x * x, axis=-1, keepdims=True)
    var = ms - mu * mu
    inv = jax.lax.rsqrt(var + LN_EPS)
    return (x - mu) * inv * gamma + beta


def _policy_fwd_kernel(x_ref, w_ref, v_ref, out_ref, *, num_inputs, hidden):
    ni, H = num_inputs, hidden
    x = x_ref[...]

    # Static slices of the packed blobs (lane-dense, zero runtime cost).
    w1 = w_ref[0:ni, :]                   # (ni, H)
    w2 = w_ref[ni:ni + H, :]              # (H, H)
    wh = w_ref[ni + H:ni + 2 * H, :]      # (H, H) fused mean|log_std, zero-padded
    b1, g1, be1 = v_ref[0:1, :], v_ref[1:2, :], v_ref[2:3, :]
    b2, g2, be2 = v_ref[3:4, :], v_ref[4:5, :], v_ref[5:6, :]
    bh = v_ref[6:7, :]                    # fused mean|log_std bias, zero-padded
    lo = v_ref[7:8, :]                    # per-column lower clamp bound
    hi = v_ref[8:9, :]                    # per-column upper clamp bound

    # backbone layer 1: Linear -> Tanh -> LayerNorm
    h = jnp.dot(x, w1, preferred_element_type=jnp.float32) + b1
    h = _layernorm(jnp.tanh(h), g1, be1)

    # backbone layer 2: Linear -> Tanh -> LayerNorm
    h = jnp.dot(h, w2, preferred_element_type=jnp.float32) + b2
    h = _layernorm(jnp.tanh(h), g2, be2)

    # fused heads: one full-width matmul, column-wise clamp, single lane-dense store.
    heads = jnp.dot(h, wh, preferred_element_type=jnp.float32) + bh   # (tb, H)
    out_ref[...] = jnp.minimum(jnp.maximum(heads, lo), hi).astype(out_ref.dtype)


def _choose_batch_tile(B):
    """One fat step when possible; even step count (multiple-of-8 rows) for big B."""
    if B <= 512:
        return B                      # single grid step (strictly best on 1-TC chips)
    steps = max(2, 2 * pl.cdiv(B, 1024))   # even number of steps for v7x's 2 TCs
    tb = pl.cdiv(B, steps)
    tb = ((tb + 7) // 8) * 8          # satisfy the (8, 128) sublane constraint
    return min(tb, B)


def policy_forward(state, packed, *, num_actions):
    """state: (B, num_inputs) f32 -> (mean, log_std), each (B, num_actions) f32."""
    B, num_inputs = state.shape
    hidden = packed["v"].shape[1]
    A = num_actions

    tb = _choose_batch_tile(B)
    grid = (pl.cdiv(B, tb),)

    kernel = functools.partial(
        _policy_fwd_kernel, num_inputs=num_inputs, hidden=hidden,
    )

    out = pl.pallas_call(
        kernel,
        out_shape=jax.ShapeDtypeStruct((B, hidden), jnp.float32),
        grid=grid,
        in_specs=[
            pl.BlockSpec((tb, num_inputs), lambda i: (i, 0)),
            # Constant block index -> packed weights stay resident across grid steps.
            pl.BlockSpec(packed["w"].shape, lambda i: (0, 0)),
            pl.BlockSpec(packed["v"].shape, lambda i: (0, 0)),
        ],
        out_specs=pl.BlockSpec((tb, hidden), lambda i: (i, 0)),
        compiler_params=pltpu.CompilerParams(dimension_semantics=("parallel",)),
    )(state, packed["w"], packed["v"])

    # NOTE: log_std must exclude the zero-padded columns -> slice to 2*A exactly.
    return out[:, :A], out[:, A:2 * A]


def init_params(key, num_inputs, num_actions, hidden=64):
    """Deterministic, PyTorch-Linear-style uniform init. Weights stored (in, out)."""
    ks = jax.random.split(key, 8)

    def lin(kw, kb, fan_in, fan_out):
        bound = 1.0 / jnp.sqrt(fan_in)
        w = jax.random.uniform(kw, (fan_in, fan_out), jnp.float32, -bound, bound)
        b = jax.random.uniform(kb, (1, fan_out), jnp.float32, -bound, bound)
        return w, b

    w1, b1 = lin(ks[0], ks[1], num_inputs, hidden)
    w2, b2 = lin(ks[2], ks[3], hidden, hidden)
    wm, bm = lin(ks[4], ks[5], hidden, num_actions)
    wl, bl = lin(ks[6], ks[7], hidden, num_actions)
    return {
        "w1": w1, "b1": b1,
        "g1": jnp.ones((1, hidden), jnp.float32), "be1": jnp.zeros((1, hidden), jnp.float32),
        "w2": w2, "b2": b2,
        "g2": jnp.ones((1, hidden), jnp.float32), "be2": jnp.zeros((1, hidden), jnp.float32),
        "wm": wm, "bm": bm,
        "wl": wl, "bl": bl,
    }


def pack_params(p):
    """Pack all parameters into two contiguous blobs (done once at init).

    w_pack: (num_inputs + 2H, H)   = w1 | w2 | [wm, wl, 0-pad]
    v_pack: (9, H)                 = b1, g1, be1, b2, g2, be2, [bm, bl, 0], lo, hi
    """
    num_inputs, hidden = p["w1"].shape
    num_actions = p["wm"].shape[1]
    assert 2 * num_actions <= hidden, "packing assumes 2*num_actions <= hidden (=64)"

    pad = hidden - 2 * num_actions
    wh = jnp.pad(jnp.concatenate([p["wm"], p["wl"]], axis=1), ((0, 0), (0, pad)))
    w_pack = jnp.concatenate([p["w1"], p["w2"], wh], axis=0)        # (ni + 2H, H)

    bh = jnp.pad(jnp.concatenate([p["bm"], p["bl"]], axis=1), ((0, 0), (0, pad)))

    # Per-column clamp bounds: mean / padded columns pass through, log_std clamped.
    col = jnp.arange(hidden)
    is_log_std = (col >= num_actions) & (col < 2 * num_actions)
    lo = jnp.where(is_log_std, LOG_STD_MIN, -jnp.inf)[None, :].astype(jnp.float32)
    hi = jnp.where(is_log_std, LOG_STD_MAX, jnp.inf)[None, :].astype(jnp.float32)

    v_pack = jnp.concatenate(
        [p["b1"], p["g1"], p["be1"], p["b2"], p["g2"], p["be2"], bh, lo, hi], axis=0
    )                                                               # (9, H)
    return {"w": w_pack, "v": v_pack}


def _ref_forward(x, p):
    def ln(h, g, b):
        mu = jnp.mean(h, -1, keepdims=True)
        var = jnp.mean((h - mu) ** 2, -1, keepdims=True)
        return (h - mu) / jnp.sqrt(var + LN_EPS) * g + b
    h = ln(jnp.tanh(x @ p["w1"] + p["b1"]), p["g1"], p["be1"])
    h = ln(jnp.tanh(h @ p["w2"] + p["b2"]), p["g2"], p["be2"])
    m = h @ p["wm"] + p["bm"]
    ls = jnp.clip(h @ p["wl"] + p["bl"], LOG_STD_MIN, LOG_STD_MAX)
    return m, ls


if __name__ == "__main__":
    num_inputs, num_actions, batch = 16, 4, 2

    key = jax.random.PRNGKey(0)
    kp, kx, kx2 = jax.random.split(key, 3)
    params = init_params(kp, num_inputs, num_actions)
    packed = pack_params(params)

    fwd = jax.jit(functools.partial(policy_forward, num_actions=num_actions))

    # Small-batch case (single grid step, tile == full batch).
    state = jax.random.normal(kx, (batch, num_inputs), jnp.float32)
    mean, log_std = fwd(state, packed)
    jax.block_until_ready((mean, log_std))

    m_ref, ls_ref = _ref_forward(state, params)
    assert mean.shape == (batch, num_actions) and log_std.shape == (batch, num_actions)
    assert jnp.allclose(mean, m_ref, atol=1e-4, rtol=1e-4)
    assert jnp.allclose(log_std, ls_ref, atol=1e-4, rtol=1e-4)

    # Large-batch case (even multi-step grid -> exercises the v7x-friendly path).
    state_big = jax.random.normal(kx2, (1024, num_inputs), jnp.float32)
    mean_b, log_std_b = fwd(state_big, packed)
    jax.block_until_ready((mean_b, log_std_b))
    m_ref_b, ls_ref_b = _ref_forward(state_big, params)
    assert jnp.allclose(mean_b, m_ref_b, atol=1e-4, rtol=1e-4)
    assert jnp.allclose(log_std_b, ls_ref_b, atol=1e-4, rtol=1e-4)

    # TODO(synk): evaluate()/get_action() sampling (Normal + tanh squash) is not part
    # of forward(); fuse it here with pltpu.prng_* if the RL loop needs it on-device.

    print("KERNEL_OK")
</pallas_src>

<mosaic_0001>
module attributes {stable_mosaic.version = 11 : i64} {
  func.func @_policy_fwd_kernel(%arg0: i32, %arg1: memref<2x16xf32, #tpu.memory_space<vmem>>, %arg2: memref<144x64xf32, #tpu.memory_space<vmem>>, %arg3: memref<9x64xf32, #tpu.memory_space<vmem>>, %arg4: memref<2x64xf32, #tpu.memory_space<vmem>>) attributes {dimension_semantics = [#tpu.dimension_semantics<parallel>], iteration_bounds = array<i64: 1>, scalar_prefetch = 0 : i64, scratch_operands = 0 : i64, tpu.core_type = #tpu.core_type<tc>, window_params = [{transform_indices = @transform_0, window_bounds = array<i64: 2, 16>}, {pipeline_mode = #tpu.pipeline_mode<synchronous>, transform_indices = @transform_1, window_bounds = array<i64: 144, 64>}, {pipeline_mode = #tpu.pipeline_mode<synchronous>, transform_indices = @transform_2, window_bounds = array<i64: 9, 64>}, {transform_indices = @transform_3, window_bounds = array<i64: 2, 64>}]} {
    %c0 = arith.constant 0 : index
    %c0_0 = arith.constant 0 : index
    %0 = vector.load %arg1[%c0, %c0_0] : memref<2x16xf32, #tpu.memory_space<vmem>>, vector<2x16xf32>
    %c0_1 = arith.constant 0 : index
    %c0_2 = arith.constant 0 : index
    %1 = vector.load %arg2[%c0_1, %c0_2] : memref<144x64xf32, #tpu.memory_space<vmem>>, vector<16x64xf32>
    %c16 = arith.constant 16 : index
    %c0_3 = arith.constant 0 : index
    %2 = vector.load %arg2[%c16, %c0_3] : memref<144x64xf32, #tpu.memory_space<vmem>>, vector<64x64xf32>
    %c80 = arith.constant 80 : index
    %c0_4 = arith.constant 0 : index
    %3 = vector.load %arg2[%c80, %c0_4] : memref<144x64xf32, #tpu.memory_space<vmem>>, vector<64x64xf32>
    %c0_5 = arith.constant 0 : index
    %c0_6 = arith.constant 0 : index
    %4 = vector.load %arg3[%c0_5, %c0_6] : memref<9x64xf32, #tpu.memory_space<vmem>>, vector<1x64xf32>
    %c1 = arith.constant 1 : index
    %c0_7 = arith.constant 0 : index
    %5 = vector.load %arg3[%c1, %c0_7] : memref<9x64xf32, #tpu.memory_space<vmem>>, vector<1x64xf32>
    %c2 = arith.constant 2 : index
    %c0_8 = arith.constant 0 : index
    %6 = vector.load %arg3[%c2, %c0_8] : memref<9x64xf32, #tpu.memory_space<vmem>>, vector<1x64xf32>
    %c3 = arith.constant 3 : index
    %c0_9 = arith.constant 0 : index
    %7 = vector.load %arg3[%c3, %c0_9] : memref<9x64xf32, #tpu.memory_space<vmem>>, vector<1x64xf32>
    %c4 = arith.constant 4 : index
    %c0_10 = arith.constant 0 : index
    %8 = vector.load %arg3[%c4, %c0_10] : memref<9x64xf32, #tpu.memory_space<vmem>>, vector<1x64xf32>
    %c5 = arith.constant 5 : index
    %c0_11 = arith.constant 0 : index
    %9 = vector.load %arg3[%c5, %c0_11] : memref<9x64xf32, #tpu.memory_space<vmem>>, vector<1x64xf32>
    %c6 = arith.constant 6 : index
    %c0_12 = arith.constant 0 : index
    %10 = vector.load %arg3[%c6, %c0_12] : memref<9x64xf32, #tpu.memory_space<vmem>>, vector<1x64xf32>
    %c7 = arith.constant 7 : index
    %c0_13 = arith.constant 0 : index
    %11 = vector.load %arg3[%c7, %c0_13] : memref<9x64xf32, #tpu.memory_space<vmem>>, vector<1x64xf32>
    %c8 = arith.constant 8 : index
    %c0_14 = arith.constant 0 : index
    %12 = vector.load %arg3[%c8, %c0_14] : memref<9x64xf32, #tpu.memory_space<vmem>>, vector<1x64xf32>
    %cst = arith.constant dense<0.000000e+00> : vector<2x64xf32>
    %13 = tpu.matmul %0, %1, %cst {dimension_numbers = #tpu.dot_dimension_numbers<[1], [0], [0], [1], [0, 0, 1, 1], [], []>} : vector<2x16xf32>, vector<16x64xf32>, vector<2x64xf32> -> vector<2x64xf32>
    %14 = vector.broadcast %4 : vector<1x64xf32> to vector<2x64xf32>
    %15 = arith.addf %13, %14 : vector<2x64xf32>
    %16 = math.tanh %15 : vector<2x64xf32>
    %cst_15 = arith.constant dense<0.000000e+00> : vector<2xf32>
    %17 = vector.multi_reduction <add>, %16, %cst_15 [1] : vector<2x64xf32> to vector<2xf32>
    %18 = vector.shape_cast %17 : vector<2xf32> to vector<2x1xf32>
    %cst_16 = arith.constant 6.400000e+01 : f32
    %19 = vector.broadcast %cst_16 : f32 to vector<2x1xf32>
    %20 = arith.divf %18, %19 : vector<2x1xf32>
    %21 = arith.mulf %16, %16 : vector<2x64xf32>
    %cst_17 = arith.constant dense<0.000000e+00> : vector<2xf32>
    %22 = vector.multi_reduction <add>, %21, %cst_17 [1] : vector<2x64xf32> to vector<2xf32>
    %23 = vector.shape_cast %22 : vector<2xf32> to vector<2x1xf32>
    %cst_18 = arith.constant 6.400000e+01 : f32
    %24 = vector.broadcast %cst_18 : f32 to vector<2x1xf32>
    %25 = arith.divf %23, %24 : vector<2x1xf32>
    %26 = arith.mulf %20, %20 : vector<2x1xf32>
    %27 = arith.subf %25, %26 : vector<2x1xf32>
    %cst_19 = arith.constant 9.99999974E-6 : f32
    %28 = vector.broadcast %cst_19 : f32 to vector<2x1xf32>
    %29 = arith.addf %27, %28 : vector<2x1xf32>
    %30 = math.rsqrt %29 : vector<2x1xf32>
    %31 = vector.broadcast %20 : vector<2x1xf32> to vector<2x64xf32>
    %32 = arith.subf %16, %31 : vector<2x64xf32>
    %33 = vector.broadcast %30 : vector<2x1xf32> to vector<2x64xf32>
    %34 = arith.mulf %32, %33 : vector<2x64xf32>
    %35 = vector.broadcast %5 : vector<1x64xf32> to vector<2x64xf32>
    %36 = arith.mulf %34, %35 : vector<2x64xf32>
    %37 = vector.broadcast %6 : vector<1x64xf32> to vector<2x64xf32>
    %38 = arith.addf %36, %37 : vector<2x64xf32>
    %cst_20 = arith.constant dense<0.000000e+00> : vector<2x64xf32>
    %39 = tpu.matmul %38, %2, %cst_20 {dimension_numbers = #tpu.dot_dimension_numbers<[1], [0], [0], [1], [0, 0, 1, 1], [], []>} : vector<2x64xf32>, vector<64x64xf32>, vector<2x64xf32> -> vector<2x64xf32>
    %40 = vector.broadcast %7 : vector<1x64xf32> to vector<2x64xf32>
    %41 = arith.addf %39, %40 : vector<2x64xf32>
    %42 = math.tanh %41 : vector<2x64xf32>
    %cst_21 = arith.constant dense<0.000000e+00> : vector<2xf32>
    %43 = vector.multi_reduction <add>, %42, %cst_21 [1] : vector<2x64xf32> to vector<2xf32>
    %44 = vector.shape_cast %43 : vector<2xf32> to vector<2x1xf32>
    %cst_22 = arith.constant 6.400000e+01 : f32
    %45 = vector.broadcast %cst_22 : f32 to vector<2x1xf32>
    %46 = arith.divf %44, %45 : vector<2x1xf32>
    %47 = arith.mulf %42, %42 : vector<2x64xf32>
    %cst_23 = arith.constant dense<0.000000e+00> : vector<2xf32>
    %48 = vector.multi_reduction <add>, %47, %cst_23 [1] : vector<2x64xf32> to vector<2xf32>
    %49 = vector.shape_cast %48 : vector<2xf32> to vector<2x1xf32>
    %cst_24 = arith.constant 6.400000e+01 : f32
    %50 = vector.broadcast %cst_24 : f32 to vector<2x1xf32>
    %51 = arith.divf %49, %50 : vector<2x1xf32>
    %52 = arith.mulf %46, %46 : vector<2x1xf32>
    %53 = arith.subf %51, %52 : vector<2x1xf32>
    %cst_25 = arith.constant 9.99999974E-6 : f32
    %54 = vector.broadcast %cst_25 : f32 to vector<2x1xf32>
    %55 = arith.addf %53, %54 : vector<2x1xf32>
    %56 = math.rsqrt %55 : vector<2x1xf32>
    %57 = vector.broadcast %46 : vector<2x1xf32> to vector<2x64xf32>
    %58 = arith.subf %42, %57 : vector<2x64xf32>
    %59 = vector.broadcast %56 : vector<2x1xf32> to vector<2x64xf32>
    %60 = arith.mulf %58, %59 : vector<2x64xf32>
    %61 = vector.broadcast %8 : vector<1x64xf32> to vector<2x64xf32>
    %62 = arith.mulf %60, %61 : vector<2x64xf32>
    %63 = vector.broadcast %9 : vector<1x64xf32> to vector<2x64xf32>
    %64 = arith.addf %62, %63 : vector<2x64xf32>
    %cst_26 = arith.constant dense<0.000000e+00> : vector<2x64xf32>
    %65 = tpu.matmul %64, %3, %cst_26 {dimension_numbers = #tpu.dot_dimension_numbers<[1], [0], [0], [1], [0, 0, 1, 1], [], []>} : vector<2x64xf32>, vector<64x64xf32>, vector<2x64xf32> -> vector<2x64xf32>
    %66 = vector.broadcast %10 : vector<1x64xf32> to vector<2x64xf32>
    %67 = arith.addf %65, %66 : vector<2x64xf32>
    %68 = vector.broadcast %11 : vector<1x64xf32> to vector<2x64xf32>
    %69 = arith.maximumf %67, %68 : vector<2x64xf32>
    %70 = vector.broadcast %12 : vector<1x64xf32> to vector<2x64xf32>
    %71 = arith.minimumf %69, %70 : vector<2x64xf32>
    %c0_27 = arith.constant 0 : index
    %c0_28 = arith.constant 0 : index
    %72 = vector.load %arg4[%c0_27, %c0_28] : memref<2x64xf32, #tpu.memory_space<vmem>>, vector<2x64xf32>
    tpu.vector_store %arg4[%c0_27, %c0_28], %71 {strides = array<i32>} : memref<2x64xf32, #tpu.memory_space<vmem>>, vector<2x64xf32>,
    return
  }
  func.func @transform_0(%arg0: i32) -> (i32, i32) {
    %c0_i32 = arith.constant 0 : i32
    %c0_i32_0 = arith.constant 0 : i32
    return %arg0, %c0_i32 : i32, i32
  }
  func.func @transform_1(%arg0: i32) -> (i32, i32) {
    %c0_i32 = arith.constant 0 : i32
    %c0_i32_0 = arith.constant 0 : i32
    %c0_i32_1 = arith.constant 0 : i32
    return %c0_i32, %c0_i32_0 : i32, i32
  }
  func.func @transform_2(%arg0: i32) -> (i32, i32) {
    %c0_i32 = arith.constant 0 : i32
    %c0_i32_0 = arith.constant 0 : i32
    %c0_i32_1 = arith.constant 0 : i32
    return %c0_i32, %c0_i32_0 : i32, i32
  }
  func.func @transform_3(%arg0: i32) -> (i32, i32) {
    %c0_i32 = arith.constant 0 : i32
    %c0_i32_0 = arith.constant 0 : i32
    return %arg0, %c0_i32 : i32, i32
  }
}

</mosaic_0001>

<llo_original>
// kernel: policy_forward.1
$region0: #{policy_forward.1}
  #allocation0 [shape = 'u32[]', space=smem, size = 0x4, offset = 0x4, fixed_abs, tag = 'smem constant byte address 0x4 - core index']
  #allocation1 [shape = 'u32[72,128]{1,0:T(1,128)}', space=vmem, size = 0x9000, scoped, tag = 'internal scratch']
  %s0 = inlined_call_operand.vmem [shape: f32[2,16], index: 0, kind: input, shape index: {}]
  %s1 = inlined_call_operand.vmem [shape: f32[144,64], index: 1, kind: input, shape index: {}]
  %s2 = inlined_call_operand.vmem [shape: f32[9,64], index: 2, kind: input, shape index: {}]
  %s3 = inlined_call_operand.vmem [shape: f32[2,64], index: 3, kind: output, shape index: {}]
  %s4 = sld [smem:[#allocation0]]
  $region22: #{policy_forward.1} parent=0
    _
  %s6 = ssub.s32 1, %s4
  %s7 = scalar_select 0, %s6, %s4
  // Predicated region
  $region2: #{policy_forward.1} parent=0 // pred_check
    _
  $region3: #{policy_forward.1} parent=0 // pred_check_branch
    %9 = sbr.rel (0) target = $region5
  $region4: #{policy_forward.1} parent=0 // pred_region
    _
  $region5: #{policy_forward.1} parent=0 // pred_fallthru
    _
  // Predicated region
  $region6: #{policy_forward.1} parent=0 // pred_check
    _
  $region7: #{policy_forward.1} parent=0 // pred_check_branch
    %11 = sbr.rel (0) target = $region9
  $region8: #{policy_forward.1} parent=0 // pred_region
    _
  $region9: #{policy_forward.1} parent=0 // pred_fallthru
    _
  // Predicated region
  $region10: #{policy_forward.1} parent=0 // pred_check
    _
  $region11: #{policy_forward.1} parent=0 // pred_check_branch
    %13 = sbr.rel (0) target = $region13
  $region12: #{policy_forward.1} parent=0 // pred_region
    _
  $region13: #{policy_forward.1} parent=0 // pred_fallthru
    _
  %v14 = vld [vmem:[%s0] sm:$0x3]
  %v15 = vld [vmem:[%s1] sm:$0xff]
  %v16 = vld [vmem:[%s1 + $0x8] sm:$0xff]
  %v17 = vld [vmem:[%s1 + $0x10] sm:$0xff]
  %v18 = vld [vmem:[%s1 + $0x18] sm:$0xff]
  %v19 = vld [vmem:[%s1 + $0x20] sm:$0xff]
  %v20 = vld [vmem:[%s1 + $0x28] sm:$0xff]
  %v21 = vld [vmem:[%s1 + $0x30] sm:$0xff]
  %v22 = vld [vmem:[%s1 + $0x38] sm:$0xff]
  %v23 = vld [vmem:[%s1 + $0x40] sm:$0xff]
  %v24 = vld [vmem:[%s1 + $0x48] sm:$0xff]
  %v25 = vld [vmem:[%s1 + $0x50] sm:$0xff]
  %v26 = vld [vmem:[%s1 + $0x58] sm:$0xff]
  %v27 = vld [vmem:[%s1 + $0x60] sm:$0xff]
  %v28 = vld [vmem:[%s1 + $0x68] sm:$0xff]
  %v29 = vld [vmem:[%s1 + $0x70] sm:$0xff]
  %v30 = vld [vmem:[%s1 + $0x78] sm:$0xff]
  %v31 = vld [vmem:[%s1 + $0x80] sm:$0xff]
  %v32 = vld [vmem:[%s1 + $0x88] sm:$0xff]
  %v33 = vld [vmem:[%s2] sm:$0x1]
  %v34 = vld [vmem:[%s2 + $0x1] sm:$0x1]
  %v35 = vld [vmem:[%s2 + $0x2] sm:$0x1]
  %v36 = vld [vmem:[%s2 + $0x3] sm:$0x1]
  %v37 = vld [vmem:[%s2 + $0x4] sm:$0x1]
  %v38 = vld [vmem:[%s2 + $0x5] sm:$0x1]
  %v39 = vld [vmem:[%s2 + $0x6] sm:$0x1]
  %v40 = vld [vmem:[%s2 + $0x7] sm:$0x1]
  %v41 = vld [vmem:[%s2 + $0x8] sm:$0x1]
  %v42 = vperm.slane %v33, 0
  %vm43 = vcmask 130048
  %v45 = vsel %vm43, %v14, 0
  %47 = vmatpush.msra.mxu0 0.0
  %48 = vmatpush.msra.mxu0 0.0
  %49 = vmatpush.msra.mxu0 0.0
  %50 = vmatpush.msra.mxu0 0.0
  %51 = vmatpush.msra.mxu0 0.0
  %52 = vmatpush.msra.mxu0 0.0
  %53 = vmatpush.msra.mxu0 0.0
  %54 = vmatpush.msra.mxu0 0.0
  %55 = vmatpush.msra.mxu0 0.0
  %56 = vmatpush.msra.mxu0 0.0
  %57 = vmatpush.msra.mxu0 0.0
  %58 = vmatpush.msra.mxu0 0.0
  %59 = vmatpush.msra.mxu0 0.0
  %60 = vmatpush.msra.mxu0 0.0
  %61 = vmatpush.msra.mxu0 %v16
  %62 = vmatpush.msra.mxu0 %v15
  %63 = vmatmul.f32.gmra.mxu0 %v45
  %v64 = vpop.f32.mrf.mxu0
  %v65 = vadd.f32 %v42, %v64
  %66 = vdwg.mxu0
  %v67 = vtanh.pop %v65
  %vm68 = vcmask 517120
  %v69 = vsel %vm68, %v67, 0.0
  %70 = vadd.xlane.f32.xlu0 %v69
  %v71 = vpop.xlane.xlu0 %70
  %v72 = vrcp.pop 64.0
  %v73 = vmul.f32 64.0, %v72
  %v74 = vsub.f32 1.0, %v73
  %v75 = vmul.f32 %v72, %v74
  %v76 = vadd.f32 %v72, %v75
  %vm77 = vweird.f32 %v72
  %v78 = vsel %vm77, %v72, %v76
  %v79 = vmul.f32 %v71, %v78
  %v80 = vmul.f32 %v67, %v67
  %v81 = vsel %vm68, %v80, 0.0
  %82 = vadd.xlane.f32.xlu0 %v81
  %v83 = vpop.xlane.xlu0 %82
  %v84 = vmul.f32 %v83, %v78
  %v85 = vmul.f32 %v79, %v79
  %v86 = vsub.f32 %v84, %v85
  %v87 = vadd.f32 %v86, 1e-05
  %v88 = vrsqrt.pop %v87
  %v89 = vmul.f32 %v88, %v87
  %v90 = vmul.f32 %v89, %v88
  %v91 = vmul.f32 0.5, %v90
  %v92 = vsub.f32 1.5, %v91
  %v93 = vmul.f32 %v88, %v92
  %vm94 = vweird.f32 %v87
  %vm95 = vweird.f32 %v88
  %vm96 = vmor %vm94, %vm95
  %v97 = vsel %vm96, %v88, %v93
  %v98 = vsub.f32 %v67, %v79
  %v99 = vmul.f32 %v98, %v97
  %v100 = vperm.slane %v34, 0
  %v101 = vmul.f32 %v99, %v100
  %v102 = vperm.slane %v35, 0
  %v103 = vadd.f32 %v101, %v102
  %v104 = vperm.slane %v36, 0
  %vm105 = vcmask 523264
  %v107 = vsel %vm105, %v103, 0
  %109 = vmatpush.msra.mxu0 0.0
  %110 = vmatpush.msra.mxu0 0.0
  %111 = vmatpush.msra.mxu0 0.0
  %112 = vmatpush.msra.mxu0 0.0
  %113 = vmatpush.msra.mxu0 0.0
  %114 = vmatpush.msra.mxu0 0.0
  %115 = vmatpush.msra.mxu0 0.0
  %116 = vmatpush.msra.mxu0 0.0
  %117 = vmatpush.msra.mxu0 %v24
  %118 = vmatpush.msra.mxu0 %v23
  %119 = vmatpush.msra.mxu0 %v22
  %120 = vmatpush.msra.mxu0 %v21
  %121 = vmatpush.msra.mxu0 %v20
  %122 = vmatpush.msra.mxu0 %v19
  %123 = vmatpush.msra.mxu0 %v18
  %124 = vmatpush.msra.mxu0 %v17
  %125 = vmatmul.f32.gmra.mxu0 %v107
  %v126 = vpop.f32.mrf.mxu0
  %v127 = vadd.f32 %v104, %v126
  %128 = vdwg.mxu0
  %v129 = vtanh.pop %v127
  %v130 = vsel %vm68, %v129, 0.0
  %131 = vadd.xlane.f32.xlu0 %v130
  %v132 = vpop.xlane.xlu0 %131
  %v133 = vmul.f32 %v132, %v78
  %v134 = vmul.f32 %v129, %v129
  %v135 = vsel %vm68, %v134, 0.0
  %136 = vadd.xlane.f32.xlu0 %v135
  %v137 = vpop.xlane.xlu0 %136
  %v138 = vmul.f32 %v137, %v78
  %v139 = vmul.f32 %v133, %v133
  %v140 = vsub.f32 %v138, %v139
  %v141 = vadd.f32 %v140, 1e-05
  %v142 = vrsqrt.pop %v141
  %v143 = vmul.f32 %v142, %v141
  %v144 = vmul.f32 %v143, %v142
  %v145 = vmul.f32 0.5, %v144
  %v146 = vsub.f32 1.5, %v145
  %v147 = vmul.f32 %v142, %v146
  %vm148 = vweird.f32 %v141
  %vm149 = vweird.f32 %v142
  %vm150 = vmor %vm148, %vm149
  %v151 = vsel %vm150, %v142, %v147
  %v152 = vsub.f32 %v129, %v133
  %v153 = vmul.f32 %v152, %v151
  %v154 = vperm.slane %v37, 0
  %v155 = vmul.f32 %v153, %v154
  %v156 = vperm.slane %v38, 0
  %v157 = vadd.f32 %v155, %v156
  %v158 = vperm.slane %v39, 0
  %v160 = vsel %vm105, %v157, 0
  %162 = vmatpush.msra.mxu0 0.0
  %163 = vmatpush.msra.mxu0 0.0
  %164 = vmatpush.msra.mxu0 0.0
  %165 = vmatpush.msra.mxu0 0.0
  %166 = vmatpush.msra.mxu0 0.0
  %167 = vmatpush.msra.mxu0 0.0
  %168 = vmatpush.msra.mxu0 0.0
  %169 = vmatpush.msra.mxu0 0.0
  %170 = vmatpush.msra.mxu0 %v32
  %171 = vmatpush.msra.mxu0 %v31
  %172 = vmatpush.msra.mxu0 %v30
  %173 = vmatpush.msra.mxu0 %v29
  %174 = vmatpush.msra.mxu0 %v28
  %175 = vmatpush.msra.mxu0 %v27
  %176 = vmatpush.msra.mxu0 %v26
  %177 = vmatpush.msra.mxu0 %v25
  %178 = vmatmul.f32.gmra.mxu0 %v160
  %v179 = vpop.f32.mrf.mxu0
  %v180 = vadd.f32 %v158, %v179
  %181 = vdwg.mxu0
  %v182 = vperm.slane %v40, 0
  %v183 = vmax.f32 %v180, %v182
  %v184 = vperm.slane %v41, 0
  %v185 = vmin.f32 %v183, %v184
  %186 = vst.msk [vmem:[%s3] sm:$0x3] %vm68, %v185
  // Predicated region
  $region14: #{policy_forward.1} parent=0 // pred_check
    _
  $region15: #{policy_forward.1} parent=0 // pred_check_branch
    %188 = sbr.rel (0) target = $region17
  $region16: #{policy_forward.1} parent=0 // pred_region
    _
  $region17: #{policy_forward.1} parent=0 // pred_fallthru
    _
  // Predicated region
  $region18: #{policy_forward.1} parent=0 // pred_check
    _
  $region19: #{policy_forward.1} parent=0 // pred_check_branch
    %190 = sbr.rel (0) target = $region21
  $region20: #{policy_forward.1} parent=0 // pred_region
    _
  $region21: #{policy_forward.1} parent=0 // pred_fallthru
    _

</llo_original>
